<compile_context>
chip_gen: v5e
topology: v5e:2x2
jax: 0.10.0
libtpu: 0.0.40
codegen_flags: <defaults>
</compile_context>

<pallas_src>
import jax
import jax.numpy as jnp
from jax.experimental import pallas as pl
from jax.experimental.pallas import tpu as pltpu


LANES = 128          # vreg lane width
HIDDEN = 8           # hidden units of fc: Linear(1, 8)


def _classificador_kernel(w1_ref, b1_ref, w2_ref, b2_ref, x_ref, o_ref):
    """Fused forward pass over one lane-dense tile.

    w1_ref : (8,) f32 SMEM   fc weight (PyTorch (8,1) flattened)
    b1_ref : (8,) f32 SMEM   fc bias
    w2_ref : (8,) f32 SMEM   0.5 * output weight (PyTorch (1,8) flattened)
    b2_ref : (1,) f32 SMEM   0.5 * output bias
    x_ref  : (TM, 128) f32 VMEM   lane-dense input tile (one sample / element)
    o_ref  : (TM, 128) f32 VMEM   lane-dense output tile
    """
    # Hoist every SMEM scalar read out of the unrolled hidden-unit loop so the
    # splats are issued once per tile, not per vreg / per unit.
    w1 = [w1_ref[j] for j in range(HIDDEN)]
    b1 = [b1_ref[j] for j in range(HIDDEN)]
    w2 = [w2_ref[j] for j in range(HIDDEN)]
    b2 = b2_ref[0]

    x = x_ref[...]                                  # (TM, 128) full-width VPU data

    # acc accumulates 0.5 * (sum_j out_w_j * relu(fc_w_j * x + fc_b_j) + out_b)
    # (the 0.5 is already folded into w2/b2 by the wrapper).
    acc = jnp.full_like(x, b2)
    for j in range(HIDDEN):
        h = jnp.maximum(w1[j] * x + b1[j], 0.0)
        acc = acc + w2[j] * h

    # sigmoid(y) == 0.5 * tanh(0.5 * y) + 0.5, and acc == 0.5 * y already.
    o_ref[...] = 0.5 * jnp.tanh(acc) + 0.5


def _round_up(n, m):
    return ((n + m - 1) // m) * m


def classificador_forward(x, params, tile_rows=2048):
    """x: (B, 1) float32. params: dict of PyTorch-convention weights.

    Returns (B, 1) float32, matching torch.sigmoid(out(relu(fc(x)))).
    """
    B = x.shape[0]
    if B == 0:
        return jnp.zeros((0, 1), jnp.float32)

    # --- Lane-dense slab (wrapper-side layout plumbing) ------------------
    xf = x.reshape(-1).astype(jnp.float32)          # (B,)
    rows = pl.cdiv(B, LANES)
    total = rows * LANES
    if total != B:
        # Pad only to the next 128 boundary (<= 127 elems). When B % 128 == 0
        # this branch is skipped and the reshape below is a free bitcast.
        xf = jnp.pad(xf, (0, total - B))
    x2 = xf.reshape(rows, LANES)                    # lane-dense input slab

    # Tile rows: multiple of 8 (sublane), sized so the grid has ~4 steps when
    # possible (keeps both v7x TensorCores busy), capped at tile_rows.
    tm = max(8, min(tile_rows, _round_up(pl.cdiv(rows, 4), 8)))
    grid = (pl.cdiv(rows, tm),)                     # partial edge block is OK

    # Tiny weights as flat SMEM scalars; fold sigmoid's 0.5 into layer 2.
    w1 = params["fc_w"].reshape(HIDDEN).astype(jnp.float32)            # (8,)
    b1 = params["fc_b"].reshape(HIDDEN).astype(jnp.float32)            # (8,)
    w2h = (0.5 * params["out_w"]).reshape(HIDDEN).astype(jnp.float32)  # (8,)
    b2h = (0.5 * params["out_b"]).reshape(1).astype(jnp.float32)       # (1,)

    smem = pl.BlockSpec(memory_space=pltpu.MemorySpace.SMEM)

    out2 = pl.pallas_call(
        _classificador_kernel,
        out_shape=jax.ShapeDtypeStruct((rows, LANES), jnp.float32),
        grid_spec=pltpu.PrefetchScalarGridSpec(
            num_scalar_prefetch=0,
            grid=grid,
            in_specs=[
                smem,                                            # w1
                smem,                                            # b1
                smem,                                            # w2 (scaled)
                smem,                                            # b2 (scaled)
                pl.BlockSpec((tm, LANES), lambda i: (i, 0)),     # x slab tile
            ],
            out_specs=pl.BlockSpec((tm, LANES), lambda i: (i, 0)),
        ),
        compiler_params=pltpu.CompilerParams(
            dimension_semantics=("parallel",),       # megacore / v7x 2-TC sharding
        ),
    )(w1, b1, w2h, b2h, x2)

    # Restore (B, 1). When B % 128 == 0 this is slice-free (pure reshape).
    return out2.reshape(-1)[:B].reshape(B, 1)


def init_params(key):
    """Deterministic init matching nn.Linear shapes (uniform like PyTorch)."""
    k1, k2, k3, k4 = jax.random.split(key, 4)
    # fc: Linear(1, 8) -> weight (8, 1), bias (8,)
    bound1 = 1.0  # 1/sqrt(in_features=1)
    fc_w = jax.random.uniform(k1, (8, 1), jnp.float32, -bound1, bound1)
    fc_b = jax.random.uniform(k2, (8,), jnp.float32, -bound1, bound1)
    # output: Linear(8, 1) -> weight (1, 8), bias (1,)
    bound2 = 1.0 / jnp.sqrt(8.0)
    out_w = jax.random.uniform(k3, (1, 8), jnp.float32, -bound2, bound2)
    out_b = jax.random.uniform(k4, (1,), jnp.float32, -bound2, bound2)
    return {"fc_w": fc_w, "fc_b": fc_b, "out_w": out_w, "out_b": out_b}


def reference_forward(x, params):
    """Pure-JAX reference mirroring the PyTorch forward."""
    h = x @ params["fc_w"].T + params["fc_b"]
    h = jnp.maximum(h, 0.0)
    y = h @ params["out_w"].T + params["out_b"]
    return jax.nn.sigmoid(y)


if __name__ == "__main__":
    key = jax.random.PRNGKey(0)
    pkey, xkey1, xkey2 = jax.random.split(key, 3)
    params = init_params(pkey)

    # Small batch of scalar inputs (parity-of-number style), shape (B, 1).
    B = 8
    x_small = jax.random.uniform(xkey1, (B, 1), jnp.float32, 0.0, 10.0)
    out_small = jax.block_until_ready(classificador_forward(x_small, params))
    ref_small = reference_forward(x_small, params)
    assert out_small.shape == (B, 1), out_small.shape
    assert jnp.allclose(out_small, ref_small, atol=1e-5, rtol=1e-5)

    # Lane-aligned batch exercises the zero-copy (no pad / no slice) path.
    B2 = 256
    x_big = jax.random.uniform(xkey2, (B2, 1), jnp.float32, 0.0, 10.0)
    out_big = jax.block_until_ready(classificador_forward(x_big, params))
    ref_big = reference_forward(x_big, params)
    assert out_big.shape == (B2, 1), out_big.shape
    assert jnp.allclose(out_big, ref_big, atol=1e-5, rtol=1e-5)

    print("KERNEL_OK")
</pallas_src>

<mosaic_0001>
module attributes {stable_mosaic.version = 11 : i64} {
  func.func @_classificador_kernel(%arg0: i32, %arg1: memref<8xf32, #tpu.memory_space<smem>>, %arg2: memref<8xf32, #tpu.memory_space<smem>>, %arg3: memref<8xf32, #tpu.memory_space<smem>>, %arg4: memref<1xf32, #tpu.memory_space<smem>>, %arg5: memref<8x128xf32, #tpu.memory_space<vmem>>, %arg6: memref<8x128xf32, #tpu.memory_space<vmem>>) attributes {dimension_semantics = [#tpu.dimension_semantics<parallel>], iteration_bounds = array<i64: 1>, scalar_prefetch = 0 : i64, scratch_operands = 0 : i64, tpu.core_type = #tpu.core_type<tc>, window_params = [{transform_indices = @transform_0, window_bounds = array<i64: 8>}, {transform_indices = @transform_1, window_bounds = array<i64: 8>}, {transform_indices = @transform_2, window_bounds = array<i64: 8>}, {transform_indices = @transform_3, window_bounds = array<i64: 1>}, {transform_indices = @transform_4, window_bounds = array<i64: 8, 128>}, {transform_indices = @transform_5, window_bounds = array<i64: 8, 128>}]} {
    %c0 = arith.constant 0 : index
    %0 = memref.load %arg1[%c0] : memref<8xf32, #tpu.memory_space<smem>>
    %c1 = arith.constant 1 : index
    %1 = memref.load %arg1[%c1] : memref<8xf32, #tpu.memory_space<smem>>
    %c2 = arith.constant 2 : index
    %2 = memref.load %arg1[%c2] : memref<8xf32, #tpu.memory_space<smem>>
    %c3 = arith.constant 3 : index
    %3 = memref.load %arg1[%c3] : memref<8xf32, #tpu.memory_space<smem>>
    %c4 = arith.constant 4 : index
    %4 = memref.load %arg1[%c4] : memref<8xf32, #tpu.memory_space<smem>>
    %c5 = arith.constant 5 : index
    %5 = memref.load %arg1[%c5] : memref<8xf32, #tpu.memory_space<smem>>
    %c6 = arith.constant 6 : index
    %6 = memref.load %arg1[%c6] : memref<8xf32, #tpu.memory_space<smem>>
    %c7 = arith.constant 7 : index
    %7 = memref.load %arg1[%c7] : memref<8xf32, #tpu.memory_space<smem>>
    %c0_0 = arith.constant 0 : index
    %8 = memref.load %arg2[%c0_0] : memref<8xf32, #tpu.memory_space<smem>>
    %c1_1 = arith.constant 1 : index
    %9 = memref.load %arg2[%c1_1] : memref<8xf32, #tpu.memory_space<smem>>
    %c2_2 = arith.constant 2 : index
    %10 = memref.load %arg2[%c2_2] : memref<8xf32, #tpu.memory_space<smem>>
    %c3_3 = arith.constant 3 : index
    %11 = memref.load %arg2[%c3_3] : memref<8xf32, #tpu.memory_space<smem>>
    %c4_4 = arith.constant 4 : index
    %12 = memref.load %arg2[%c4_4] : memref<8xf32, #tpu.memory_space<smem>>
    %c5_5 = arith.constant 5 : index
    %13 = memref.load %arg2[%c5_5] : memref<8xf32, #tpu.memory_space<smem>>
    %c6_6 = arith.constant 6 : index
    %14 = memref.load %arg2[%c6_6] : memref<8xf32, #tpu.memory_space<smem>>
    %c7_7 = arith.constant 7 : index
    %15 = memref.load %arg2[%c7_7] : memref<8xf32, #tpu.memory_space<smem>>
    %c0_8 = arith.constant 0 : index
    %16 = memref.load %arg3[%c0_8] : memref<8xf32, #tpu.memory_space<smem>>
    %c1_9 = arith.constant 1 : index
    %17 = memref.load %arg3[%c1_9] : memref<8xf32, #tpu.memory_space<smem>>
    %c2_10 = arith.constant 2 : index
    %18 = memref.load %arg3[%c2_10] : memref<8xf32, #tpu.memory_space<smem>>
    %c3_11 = arith.constant 3 : index
    %19 = memref.load %arg3[%c3_11] : memref<8xf32, #tpu.memory_space<smem>>
    %c4_12 = arith.constant 4 : index
    %20 = memref.load %arg3[%c4_12] : memref<8xf32, #tpu.memory_space<smem>>
    %c5_13 = arith.constant 5 : index
    %21 = memref.load %arg3[%c5_13] : memref<8xf32, #tpu.memory_space<smem>>
    %c6_14 = arith.constant 6 : index
    %22 = memref.load %arg3[%c6_14] : memref<8xf32, #tpu.memory_space<smem>>
    %c7_15 = arith.constant 7 : index
    %23 = memref.load %arg3[%c7_15] : memref<8xf32, #tpu.memory_space<smem>>
    %c0_16 = arith.constant 0 : index
    %24 = memref.load %arg4[%c0_16] : memref<1xf32, #tpu.memory_space<smem>>
    %c0_17 = arith.constant 0 : index
    %c0_18 = arith.constant 0 : index
    %25 = vector.load %arg5[%c0_17, %c0_18] : memref<8x128xf32, #tpu.memory_space<vmem>>, vector<8x128xf32>
    %26 = vector.broadcast %24 : f32 to vector<8x128xf32>
    %27 = vector.broadcast %0 : f32 to vector<8x128xf32>
    %28 = arith.mulf %27, %25 : vector<8x128xf32>
    %29 = vector.broadcast %8 : f32 to vector<8x128xf32>
    %30 = arith.addf %28, %29 : vector<8x128xf32>
    %cst = arith.constant 0.000000e+00 : f32
    %31 = vector.broadcast %cst : f32 to vector<8x128xf32>
    %32 = arith.maximumf %30, %31 : vector<8x128xf32>
    %33 = vector.broadcast %16 : f32 to vector<8x128xf32>
    %34 = arith.mulf %33, %32 : vector<8x128xf32>
    %35 = arith.addf %26, %34 : vector<8x128xf32>
    %36 = vector.broadcast %1 : f32 to vector<8x128xf32>
    %37 = arith.mulf %36, %25 : vector<8x128xf32>
    %38 = vector.broadcast %9 : f32 to vector<8x128xf32>
    %39 = arith.addf %37, %38 : vector<8x128xf32>
    %cst_19 = arith.constant 0.000000e+00 : f32
    %40 = vector.broadcast %cst_19 : f32 to vector<8x128xf32>
    %41 = arith.maximumf %39, %40 : vector<8x128xf32>
    %42 = vector.broadcast %17 : f32 to vector<8x128xf32>
    %43 = arith.mulf %42, %41 : vector<8x128xf32>
    %44 = arith.addf %35, %43 : vector<8x128xf32>
    %45 = vector.broadcast %2 : f32 to vector<8x128xf32>
    %46 = arith.mulf %45, %25 : vector<8x128xf32>
    %47 = vector.broadcast %10 : f32 to vector<8x128xf32>
    %48 = arith.addf %46, %47 : vector<8x128xf32>
    %cst_20 = arith.constant 0.000000e+00 : f32
    %49 = vector.broadcast %cst_20 : f32 to vector<8x128xf32>
    %50 = arith.maximumf %48, %49 : vector<8x128xf32>
    %51 = vector.broadcast %18 : f32 to vector<8x128xf32>
    %52 = arith.mulf %51, %50 : vector<8x128xf32>
    %53 = arith.addf %44, %52 : vector<8x128xf32>
    %54 = vector.broadcast %3 : f32 to vector<8x128xf32>
    %55 = arith.mulf %54, %25 : vector<8x128xf32>
    %56 = vector.broadcast %11 : f32 to vector<8x128xf32>
    %57 = arith.addf %55, %56 : vector<8x128xf32>
    %cst_21 = arith.constant 0.000000e+00 : f32
    %58 = vector.broadcast %cst_21 : f32 to vector<8x128xf32>
    %59 = arith.maximumf %57, %58 : vector<8x128xf32>
    %60 = vector.broadcast %19 : f32 to vector<8x128xf32>
    %61 = arith.mulf %60, %59 : vector<8x128xf32>
    %62 = arith.addf %53, %61 : vector<8x128xf32>
    %63 = vector.broadcast %4 : f32 to vector<8x128xf32>
    %64 = arith.mulf %63, %25 : vector<8x128xf32>
    %65 = vector.broadcast %12 : f32 to vector<8x128xf32>
    %66 = arith.addf %64, %65 : vector<8x128xf32>
    %cst_22 = arith.constant 0.000000e+00 : f32
    %67 = vector.broadcast %cst_22 : f32 to vector<8x128xf32>
    %68 = arith.maximumf %66, %67 : vector<8x128xf32>
    %69 = vector.broadcast %20 : f32 to vector<8x128xf32>
    %70 = arith.mulf %69, %68 : vector<8x128xf32>
    %71 = arith.addf %62, %70 : vector<8x128xf32>
    %72 = vector.broadcast %5 : f32 to vector<8x128xf32>
    %73 = arith.mulf %72, %25 : vector<8x128xf32>
    %74 = vector.broadcast %13 : f32 to vector<8x128xf32>
    %75 = arith.addf %73, %74 : vector<8x128xf32>
    %cst_23 = arith.constant 0.000000e+00 : f32
    %76 = vector.broadcast %cst_23 : f32 to vector<8x128xf32>
    %77 = arith.maximumf %75, %76 : vector<8x128xf32>
    %78 = vector.broadcast %21 : f32 to vector<8x128xf32>
    %79 = arith.mulf %78, %77 : vector<8x128xf32>
    %80 = arith.addf %71, %79 : vector<8x128xf32>
    %81 = vector.broadcast %6 : f32 to vector<8x128xf32>
    %82 = arith.mulf %81, %25 : vector<8x128xf32>
    %83 = vector.broadcast %14 : f32 to vector<8x128xf32>
    %84 = arith.addf %82, %83 : vector<8x128xf32>
    %cst_24 = arith.constant 0.000000e+00 : f32
    %85 = vector.broadcast %cst_24 : f32 to vector<8x128xf32>
    %86 = arith.maximumf %84, %85 : vector<8x128xf32>
    %87 = vector.broadcast %22 : f32 to vector<8x128xf32>
    %88 = arith.mulf %87, %86 : vector<8x128xf32>
    %89 = arith.addf %80, %88 : vector<8x128xf32>
    %90 = vector.broadcast %7 : f32 to vector<8x128xf32>
    %91 = arith.mulf %90, %25 : vector<8x128xf32>
    %92 = vector.broadcast %15 : f32 to vector<8x128xf32>
    %93 = arith.addf %91, %92 : vector<8x128xf32>
    %cst_25 = arith.constant 0.000000e+00 : f32
    %94 = vector.broadcast %cst_25 : f32 to vector<8x128xf32>
    %95 = arith.maximumf %93, %94 : vector<8x128xf32>
    %96 = vector.broadcast %23 : f32 to vector<8x128xf32>
    %97 = arith.mulf %96, %95 : vector<8x128xf32>
    %98 = arith.addf %89, %97 : vector<8x128xf32>
    %99 = math.tanh %98 : vector<8x128xf32>
    %cst_26 = arith.constant 5.000000e-01 : f32
    %100 = vector.broadcast %cst_26 : f32 to vector<8x128xf32>
    %101 = arith.mulf %100, %99 : vector<8x128xf32>
    %cst_27 = arith.constant 5.000000e-01 : f32
    %102 = vector.broadcast %cst_27 : f32 to vector<8x128xf32>
    %103 = arith.addf %101, %102 : vector<8x128xf32>
    %c0_28 = arith.constant 0 : index
    %c0_29 = arith.constant 0 : index
    %104 = vector.load %arg6[%c0_28, %c0_29] : memref<8x128xf32, #tpu.memory_space<vmem>>, vector<8x128xf32>
    tpu.vector_store %arg6[%c0_28, %c0_29], %103 {strides = array<i32>} : memref<8x128xf32, #tpu.memory_space<vmem>>, vector<8x128xf32>,
    return
  }
  func.func @transform_0(%arg0: i32) -> i32 {
    %c0_i32 = arith.constant 0 : i32
    %c0_i32_0 = arith.constant 0 : i32
    return %c0_i32 : i32
  }
  func.func @transform_1(%arg0: i32) -> i32 {
    %c0_i32 = arith.constant 0 : i32
    %c0_i32_0 = arith.constant 0 : i32
    return %c0_i32 : i32
  }
  func.func @transform_2(%arg0: i32) -> i32 {
    %c0_i32 = arith.constant 0 : i32
    %c0_i32_0 = arith.constant 0 : i32
    return %c0_i32 : i32
  }
  func.func @transform_3(%arg0: i32) -> i32 {
    %c0_i32 = arith.constant 0 : i32
    %c0_i32_0 = arith.constant 0 : i32
    return %c0_i32 : i32
  }
  func.func @transform_4(%arg0: i32) -> (i32, i32) {
    %c0_i32 = arith.constant 0 : i32
    %c0_i32_0 = arith.constant 0 : i32
    return %arg0, %c0_i32 : i32, i32
  }
  func.func @transform_5(%arg0: i32) -> (i32, i32) {
    %c0_i32 = arith.constant 0 : i32
    %c0_i32_0 = arith.constant 0 : i32
    return %arg0, %c0_i32 : i32, i32
  }
}

</mosaic_0001>

<llo_original>
// kernel: tpu_custom_call.1
$region0: #{tpu_custom_call.1}
  #allocation0 [shape = 'u32[]', space=smem, size = 0x4, offset = 0x4, fixed_abs, tag = 'smem constant byte address 0x4 - core index']
  #allocation1 [shape = 'u32[72,128]{1,0:T(1,128)}', space=vmem, size = 0x9000, scoped, tag = 'internal scratch']
  #allocation2 [shape = 'f32[1]{0:T(128)S(6)}', space=smem, size = 0x200, scoped, tag = 'scoped memory for tpu_custom_call.1']
  %s0 = inlined_call_operand.vmem [shape: f32[8], index: 0, kind: input, shape index: {}]
  %s1 = inlined_call_operand.vmem [shape: f32[8], index: 1, kind: input, shape index: {}]
  %s2 = inlined_call_operand.vmem [shape: f32[8], index: 2, kind: input, shape index: {}]
  %s3 = inlined_call_operand.<no memory space> [shape: f32[1], index: 3, kind: input, shape index: {}]
  %s4 = inlined_call_operand.vmem [shape: f32[1,128], index: 4, kind: input, shape index: {}]
  %s5 = inlined_call_operand.hbm [shape: f32[1,128], index: 5, kind: output, shape index: {}]
  %s6 = sld [smem:[#allocation0]]
  $region42: #{tpu_custom_call.1} parent=0
    _
  %s8 = ssub.s32 1, %s6
  %s9 = scalar_select 0, %s8, %s6
  %10 = sst [smem:[#allocation2]] %s3
  $region1: #{tpu_custom_call.1} parent=0
    #allocation3 [shape = 'u8[512]{0}', space=smem, size = 0x200, scoped, tag = 'input window, operand 0, single buffered']
    #allocation4 [shape = 's32[1]{0}', space=sflag, size = 0x4, scoped, tag = 'scoped memory for tpu_custom_call.1']
    #allocation5 [shape = 's32[1]{0}', space=sflag, size = 0x4, scoped, tag = 'scoped memory for tpu_custom_call.1']
    #allocation6 [shape = 'u8[512]{0}', space=smem, size = 0x200, scoped, tag = 'input window, operand 1, single buffered']
    #allocation7 [shape = 's32[1]{0}', space=sflag, size = 0x4, scoped, tag = 'scoped memory for tpu_custom_call.1']
    #allocation8 [shape = 'u8[512]{0}', space=smem, size = 0x200, scoped, tag = 'input window, operand 2, single buffered']
    #allocation9 [shape = 'u8[4096]{0}', space=vmem, size = 0x1000, scoped, tag = 'output window, operand 0, single buffered']
    %11 = vsyncpa [#allocation5], 0
    %12 = vsyncpa [#allocation7], 0
    %13 = vsyncpa [#allocation4], 0
    // Predicated region
    $region2: #{tpu_custom_call.1} parent=1 // pred_check
      _
    $region3: #{tpu_custom_call.1} parent=1 // pred_check_branch
      %15 = sbr.rel (0) target = $region5
    $region4: #{tpu_custom_call.1} parent=1 // pred_region
      %17 = vsyncadd [#allocation5], 0
      %s19 = sshll.u32 %s0, 4
      %s20 = int_to_ptr.vmem [resolvable:$true] %s19
      %22 = dma.vmem_to_smem %s20, 16, [#allocation3], [#allocation5]
    $region5: #{tpu_custom_call.1} parent=1 // pred_fallthru
      _
    // Predicated region
    $region6: #{tpu_custom_call.1} parent=1 // pred_check
      _
    $region7: #{tpu_custom_call.1} parent=1 // pred_check_branch
      %24 = sbr.rel (0) target = $region9
    $region8: #{tpu_custom_call.1} parent=1 // pred_region
      %26 = vsyncadd [#allocation7], 0
      %s28 = sshll.u32 %s1, 4
      %s29 = int_to_ptr.vmem [resolvable:$true] %s28
      %31 = dma.vmem_to_smem %s29, 16, [#allocation6], [#allocation7]
    $region9: #{tpu_custom_call.1} parent=1 // pred_fallthru
      _
    // Predicated region
    $region10: #{tpu_custom_call.1} parent=1 // pred_check
      _
    $region11: #{tpu_custom_call.1} parent=1 // pred_check_branch
      %33 = sbr.rel (0) target = $region13
    $region12: #{tpu_custom_call.1} parent=1 // pred_region
      %35 = vsyncadd [#allocation7], 0
      %s37 = sshll.u32 %s2, 4
      %s38 = int_to_ptr.vmem [resolvable:$true] %s37
      %40 = dma.vmem_to_smem %s38, 16, [#allocation8], [#allocation7]
    $region13: #{tpu_custom_call.1} parent=1 // pred_fallthru
      _
    // Predicated region
    $region14: #{tpu_custom_call.1} parent=1 // pred_check
      _
    $region15: #{tpu_custom_call.1} parent=1 // pred_check_branch
      %42 = sbr.rel (0) target = $region17
    $region16: #{tpu_custom_call.1} parent=1 // pred_region
      _
    $region17: #{tpu_custom_call.1} parent=1 // pred_fallthru
      _
    // Predicated region
    $region18: #{tpu_custom_call.1} parent=1 // pred_check
      _
    $region19: #{tpu_custom_call.1} parent=1 // pred_check_branch
      %44 = sbr.rel (0) target = $region21
    $region20: #{tpu_custom_call.1} parent=1 // pred_region
      _
    $region21: #{tpu_custom_call.1} parent=1 // pred_fallthru
      _
    // Predicated region
    $region22: #{tpu_custom_call.1} parent=1 // pred_check
      _
    $region23: #{tpu_custom_call.1} parent=1 // pred_check_branch
      %46 = sbr.rel (0) target = $region25
    $region24: #{tpu_custom_call.1} parent=1 // pred_region
      %48 = dma.done [#allocation5], 16
    $region25: #{tpu_custom_call.1} parent=1 // pred_fallthru
      _
    // Predicated region
    $region26: #{tpu_custom_call.1} parent=1 // pred_check
      _
    $region27: #{tpu_custom_call.1} parent=1 // pred_check_branch
      %50 = sbr.rel (0) target = $region29
    $region28: #{tpu_custom_call.1} parent=1 // pred_region
      %52 = dma.done [#allocation7], 16
    $region29: #{tpu_custom_call.1} parent=1 // pred_fallthru
      _
    // Predicated region
    $region30: #{tpu_custom_call.1} parent=1 // pred_check
      _
    $region31: #{tpu_custom_call.1} parent=1 // pred_check_branch
      %54 = sbr.rel (0) target = $region33
    $region32: #{tpu_custom_call.1} parent=1 // pred_region
      %56 = dma.done [#allocation7], 16
    $region33: #{tpu_custom_call.1} parent=1 // pred_fallthru
      _
    %57 = sfence
    %s58 = sld [smem:[#allocation3]]
    %s59 = sld [smem:[#allocation3 + $0x1]]
    %s60 = sld [smem:[#allocation3 + $0x2]]
    %s61 = sld [smem:[#allocation3 + $0x3]]
    %s62 = sld [smem:[#allocation3 + $0x4]]
    %s63 = sld [smem:[#allocation3 + $0x5]]
    %s64 = sld [smem:[#allocation3 + $0x6]]
    %s65 = sld [smem:[#allocation3 + $0x7]]
    %s66 = sld [smem:[#allocation6]]
    %s67 = sld [smem:[#allocation6 + $0x1]]
    %s68 = sld [smem:[#allocation6 + $0x2]]
    %s69 = sld [smem:[#allocation6 + $0x3]]
    %s70 = sld [smem:[#allocation6 + $0x4]]
    %s71 = sld [smem:[#allocation6 + $0x5]]
    %s72 = sld [smem:[#allocation6 + $0x6]]
    %s73 = sld [smem:[#allocation6 + $0x7]]
    %s74 = sld [smem:[#allocation8]]
    %s75 = sld [smem:[#allocation8 + $0x1]]
    %s76 = sld [smem:[#allocation8 + $0x2]]
    %s77 = sld [smem:[#allocation8 + $0x3]]
    %s78 = sld [smem:[#allocation8 + $0x4]]
    %s79 = sld [smem:[#allocation8 + $0x5]]
    %s80 = sld [smem:[#allocation8 + $0x6]]
    %s81 = sld [smem:[#allocation8 + $0x7]]
    %s82 = sld [smem:[#allocation2]]
    %v83 = vld [vmem:[%s4] sm:$0xff]
    %v84 = vstv %s82
    %v85 = vstv %s58
    %v86 = vmul.f32 %v85, %v83
    %v87 = vstv %s66
    %v88 = vadd.f32 %v86, %v87
    %v89 = vmax.f32 %v88, 0.0
    %v90 = vstv %s74
    %v91 = vmul.f32 %v90, %v89
    %v92 = vadd.f32 %v84, %v91
    %v93 = vstv %s59
    %v94 = vmul.f32 %v93, %v83
    %v95 = vstv %s67
    %v96 = vadd.f32 %v94, %v95
    %v97 = vmax.f32 %v96, 0.0
    %v98 = vstv %s75
    %v99 = vmul.f32 %v98, %v97
    %v100 = vadd.f32 %v92, %v99
    %v101 = vstv %s60
    %v102 = vmul.f32 %v101, %v83
    %v103 = vstv %s68
    %v104 = vadd.f32 %v102, %v103
    %v105 = vmax.f32 %v104, 0.0
    %v106 = vstv %s76
    %v107 = vmul.f32 %v106, %v105
    %v108 = vadd.f32 %v100, %v107
    %v109 = vstv %s61
    %v110 = vmul.f32 %v109, %v83
    %v111 = vstv %s69
    %v112 = vadd.f32 %v110, %v111
    %v113 = vmax.f32 %v112, 0.0
    %v114 = vstv %s77
    %v115 = vmul.f32 %v114, %v113
    %v116 = vadd.f32 %v108, %v115
    %v117 = vstv %s62
    %v118 = vmul.f32 %v117, %v83
    %v119 = vstv %s70
    %v120 = vadd.f32 %v118, %v119
    %v121 = vmax.f32 %v120, 0.0
    %v122 = vstv %s78
    %v123 = vmul.f32 %v122, %v121
    %v124 = vadd.f32 %v116, %v123
    %v125 = vstv %s63
    %v126 = vmul.f32 %v125, %v83
    %v127 = vstv %s71
    %v128 = vadd.f32 %v126, %v127
    %v129 = vmax.f32 %v128, 0.0
    %v130 = vstv %s79
    %v131 = vmul.f32 %v130, %v129
    %v132 = vadd.f32 %v124, %v131
    %v133 = vstv %s64
    %v134 = vmul.f32 %v133, %v83
    %v135 = vstv %s72
    %v136 = vadd.f32 %v134, %v135
    %v137 = vmax.f32 %v136, 0.0
    %v138 = vstv %s80
    %v139 = vmul.f32 %v138, %v137
    %v140 = vadd.f32 %v132, %v139
    %v141 = vstv %s65
    %v142 = vmul.f32 %v141, %v83
    %v143 = vstv %s73
    %v144 = vadd.f32 %v142, %v143
    %v145 = vmax.f32 %v144, 0.0
    %v146 = vstv %s81
    %v147 = vmul.f32 %v146, %v145
    %v148 = vadd.f32 %v140, %v147
    %v149 = vtanh.pop %v148
    %v150 = vmul.f32 %v149, 0.5
    %v151 = vadd.f32 %v150, 0.5
    %152 = vst [vmem:[#allocation9] sm:$0xff] %v151
    // Predicated region
    $region34: #{tpu_custom_call.1} parent=1 // pred_check
      _
    $region35: #{tpu_custom_call.1} parent=1 // pred_check_branch
      %154 = sbr.rel (0) target = $region37
    $region36: #{tpu_custom_call.1} parent=1 // pred_region
      %156 = vsyncadd [#allocation4], 112
      %s157 = sshll.u32 [#allocation9], 4
      %s158 = int_to_ptr.vmem [resolvable:$true] %s157
      %s159 = sshll.u32 %s5, 4
      %s160 = int_to_ptr.hbm [resolvable:$true] %s159
      %165 = dma.vmem_to_hbm [thread:$0]  %s158, 16, %s160, [#allocation4], 16, 16, 1
    $region37: #{tpu_custom_call.1} parent=1 // pred_fallthru
      _
    // Predicated region
    $region38: #{tpu_custom_call.1} parent=1 // pred_check
      _
    $region39: #{tpu_custom_call.1} parent=1 // pred_check_branch
      %167 = sbr.rel (0) target = $region41
    $region40: #{tpu_custom_call.1} parent=1 // pred_region
      %169 = dma.done [#allocation4], 128
    $region41: #{tpu_custom_call.1} parent=1 // pred_fallthru
      _
    %170 = vsyncpa [#allocation4], 1
    %171 = vsyncpa [#allocation5], 1
    %172 = vsyncpa [#allocation7], 1

</llo_original>
